<compile_context>
chip_gen: v5e
topology: v5e:2x2
jax: 0.10.0
libtpu: 0.0.40
codegen_flags: <defaults>
</compile_context>

<pallas_src>
import functools

import jax
import jax.numpy as jnp
import numpy as np
from jax.experimental import pallas as pl
from jax.experimental.pallas import tpu as pltpu

# Corresponds to task_config['model_type'] in the reference file.
# MODEL_TYPE == 2 enables the GateNetwork branch (the dependent class).
MODEL_TYPE = 2


def _gate_pe_kernel(x_ref, wg_ref, bg_ref, pe_ref, out_ref, *,
                    pos_emb_method, model_type):
    """One grid step = one (tile_m, E) token tile of a single BEV plane.

    pe_ref is a precomputed (2, E) array:
      pos_emb_method == 1 : row0 = coord_embed, row1 = angle_embed
      pos_emb_method == 2 : row0 = coord_embed + angle_embed, row1 unused
      pos_emb_method == 3 : row0 = coord_embed + angle_embed, row1 unused
    """
    x = x_ref[...].astype(jnp.float32)               # (tile_m, E)
    pe0 = pe_ref[0:1, :]                             # (1, E), broadcasts over rows
    pe1 = pe_ref[1:2, :]                             # (1, E)

    if model_type == 2:
        # bf16 operands -> MXU, f32 accumulation; sigmoid + fusion stay f32.
        gate = jax.nn.sigmoid(
            jnp.dot(x.astype(jnp.bfloat16), wg_ref[...],
                    preferred_element_type=jnp.float32) + bg_ref[...])
        plane = x * gate
        if pos_emb_method == 1:
            outs = plane * pe0 + pe1
        elif pos_emb_method == 2:
            outs = plane * pe0
        else:  # pos_emb_method == 3
            outs = plane + pe0
        outs = outs + x
    else:
        if pos_emb_method == 1:
            outs = x * pe0 + pe1
        elif pos_emb_method == 2:
            outs = x * pe0
        else:  # pos_emb_method == 3
            outs = x + pe0

    out_ref[...] = outs.astype(out_ref.dtype)


def _run_plane(x2, wg_bf16, bg, pe, *, pos_emb_method, tile_m):
    """Run the fused gate + positional-embedding kernel on one (N, E) plane."""
    n, E = x2.shape

    if n <= tile_m:
        tm, n_pad = n, n                 # one block covering the full token axis
    else:
        tm = tile_m
        n_pad = pl.cdiv(n, tm) * tm
        if n_pad != n:
            x2 = jnp.pad(x2, ((0, n_pad - n), (0, 0)))

    kern = functools.partial(_gate_pe_kernel,
                             pos_emb_method=pos_emb_method,
                             model_type=MODEL_TYPE)

    out = pl.pallas_call(
        kern,
        out_shape=jax.ShapeDtypeStruct((n_pad, E), x2.dtype),
        grid_spec=pltpu.PrefetchScalarGridSpec(
            num_scalar_prefetch=0,
            grid=(n_pad // tm,),
            in_specs=[
                pl.BlockSpec((tm, E), lambda i: (i, 0)),   # plane token tile
                pl.BlockSpec((E, E), lambda i: (0, 0)),    # gate W (bf16)
                pl.BlockSpec((1, E), lambda i: (0, 0)),    # gate b
                pl.BlockSpec((2, E), lambda i: (0, 0)),    # precomputed embeds
            ],
            out_specs=pl.BlockSpec((tm, E), lambda i: (i, 0)),
        ),
        compiler_params=pltpu.CompilerParams(
            dimension_semantics=("parallel",)),            # shardable on v7x megacore
    )(x2, wg_bf16, bg, pe)

    if n_pad != n:
        out = out[:n]
    return out


def co_pos_encoder(relative_pos, cav_output, params, *, pos_emb_method=2,
                   p_h=16, p_w=16, p_z=8, tile_m=1024):
    """JAX wrapper reproducing CO_POS_ENCODER.forward (model_type = MODEL_TYPE)."""
    del p_h, p_w, p_z  # plane split is implied by per-plane kernel launches
    E = params["wg"].shape[0]

    # --- hoisted relative-position encoders (tiny MLP, computed once) --------
    rel = jnp.reshape(relative_pos, (1, -1)).astype(jnp.float32)
    coord = rel[:, :2]
    angle = rel[:, -1:]
    h1 = coord @ params["w1"] + params["b1"]              # (1, E)
    h2 = h1 @ params["w2"] + params["b2"]                 # (1, 2E)
    coord_embed = h2 @ params["w3"] + params["b3"]        # (1, E)
    angle_embed = angle @ params["wa"] + params["ba"]     # (1, E)

    if pos_emb_method == 1:
        pe = jnp.concatenate([coord_embed, angle_embed], axis=0)          # (2, E)
    else:  # 2 or 3: fold the sum once, second row unused
        pe = jnp.concatenate([coord_embed + angle_embed,
                              jnp.zeros_like(angle_embed)], axis=0)       # (2, E)
    pe = pe.astype(jnp.float32)

    wg_bf16 = params["wg"].astype(jnp.bfloat16)
    bg = params["bg"].astype(jnp.float32)

    # --- per-plane fused gate + PE kernel (no concat / split copies) ---------
    outs = []
    for plane in cav_output:
        assert plane.shape[0] == 1, "batch=1 layout (relative_pos.view(1, -1))"
        out = _run_plane(plane[0], wg_bf16, bg, pe,
                         pos_emb_method=pos_emb_method, tile_m=tile_m)
        outs.append(out[None, ...])                        # back to (1, Ni, E)
    return tuple(outs)


def _reference(relative_pos, cav_output, params, *, pos_emb_method, p_h, p_w, p_z):
    """Pure-JAX f32 reference for correctness checking (model_type = 2)."""
    x = jnp.concatenate(cav_output, axis=1)
    rel = jnp.reshape(relative_pos, (1, -1))
    coord = rel[:, :2]
    angle = rel[:, -1:]
    h1 = coord @ params["w1"] + params["b1"]
    h2 = h1 @ params["w2"] + params["b2"]
    coord_embed = h2 @ params["w3"] + params["b3"]
    angle_embed = angle @ params["wa"] + params["ba"]
    gate = jax.nn.sigmoid(x @ params["wg"] + params["bg"])
    plane = x * gate
    if pos_emb_method == 1:
        outs = plane * coord_embed + angle_embed
    elif pos_emb_method == 2:
        outs = plane * (coord_embed + angle_embed)
    else:
        outs = plane + coord_embed + angle_embed
    outs = outs + x
    s0, s1 = p_h * p_w, p_h * p_w + p_z * p_h
    return outs[:, :s0], outs[:, s0:s1], outs[:, s1:]


def init_params(key, embed_dims=128):
    """Deterministic PyTorch-Linear-style init; weights stored as (in, out)."""
    E = embed_dims

    def linear(k, fan_in, fan_out):
        kw, kb = jax.random.split(k)
        bound = 1.0 / np.sqrt(fan_in)
        w = jax.random.uniform(kw, (fan_in, fan_out), jnp.float32, -bound, bound)
        b = jax.random.uniform(kb, (1, fan_out), jnp.float32, -bound, bound)
        return w, b

    k = jax.random.split(key, 5)
    w1, b1 = linear(k[0], 2, E)          # coord encoder: Linear(2, E)
    w2, b2 = linear(k[1], E, 2 * E)      #                Linear(E, 2E)
    w3, b3 = linear(k[2], 2 * E, E)      #                Linear(2E, E)
    wa, ba = linear(k[3], 1, E)          # angle encoder: Linear(1, E)
    wg, bg = linear(k[4], E, E)          # gate network:  Linear(E, E)
    return dict(w1=w1, b1=b1, w2=w2, b2=b2, w3=w3, b3=b3,
                wa=wa, ba=ba, wg=wg, bg=bg)


if __name__ == "__main__":
    E = 128                       # embed_dims (kept at 128 for lane alignment)
    p_h, p_w, p_z = 16, 16, 8     # small BEV planes -> token counts 256 / 128 / 128
    pos_emb_method = 2

    root = jax.random.PRNGKey(0)
    kp, k1, k2, k3, k4 = jax.random.split(root, 5)

    params = init_params(kp, E)
    plane_hw = jax.random.normal(k1, (1, p_h * p_w, E), jnp.float32)
    plane_zh = jax.random.normal(k2, (1, p_z * p_h, E), jnp.float32)
    plane_wz = jax.random.normal(k3, (1, p_w * p_z, E), jnp.float32)
    relative_pos = jax.random.normal(k4, (3,), jnp.float32)   # [dx, dy, dtheta]

    cav_output = [plane_hw, plane_zh, plane_wz]

    outs = co_pos_encoder(relative_pos, cav_output, params,
                          pos_emb_method=pos_emb_method, p_h=p_h, p_w=p_w, p_z=p_z)
    outs = jax.block_until_ready(outs)

    refs = _reference(relative_pos, cav_output, params,
                      pos_emb_method=pos_emb_method, p_h=p_h, p_w=p_w, p_z=p_z)
    for o, r in zip(outs, refs):
        assert o.shape == r.shape and o.dtype == r.dtype
        # bf16 matmul operands (f32 accumulation) -> slightly looser tolerance.
        np.testing.assert_allclose(np.asarray(o), np.asarray(r), rtol=2e-2, atol=5e-2)

    print("KERNEL_OK")
</pallas_src>

<mosaic_0001>
module attributes {stable_mosaic.version = 11 : i64} {
  func.func @_gate_pe_kernel(%arg0: i32, %arg1: memref<256x128xf32, #tpu.memory_space<vmem>>, %arg2: memref<128x128xbf16, #tpu.memory_space<vmem>>, %arg3: memref<1x128xf32, #tpu.memory_space<vmem>>, %arg4: memref<2x128xf32, #tpu.memory_space<vmem>>, %arg5: memref<256x128xf32, #tpu.memory_space<vmem>>) attributes {dimension_semantics = [#tpu.dimension_semantics<parallel>], iteration_bounds = array<i64: 1>, scalar_prefetch = 0 : i64, scratch_operands = 0 : i64, tpu.core_type = #tpu.core_type<tc>, window_params = [{transform_indices = @transform_0, window_bounds = array<i64: 256, 128>}, {pipeline_mode = #tpu.pipeline_mode<synchronous>, transform_indices = @transform_1, window_bounds = array<i64: 128, 128>}, {pipeline_mode = #tpu.pipeline_mode<synchronous>, transform_indices = @transform_2, window_bounds = array<i64: 1, 128>}, {pipeline_mode = #tpu.pipeline_mode<synchronous>, transform_indices = @transform_3, window_bounds = array<i64: 2, 128>}, {transform_indices = @transform_4, window_bounds = array<i64: 256, 128>}]} {
    %c0 = arith.constant 0 : index
    %c0_0 = arith.constant 0 : index
    %0 = vector.load %arg1[%c0, %c0_0] : memref<256x128xf32, #tpu.memory_space<vmem>>, vector<256x128xf32>
    %c0_1 = arith.constant 0 : index
    %c0_2 = arith.constant 0 : index
    %1 = vector.load %arg4[%c0_1, %c0_2] : memref<2x128xf32, #tpu.memory_space<vmem>>, vector<1x128xf32>
    %2 = arith.truncf %0 : vector<256x128xf32> to vector<256x128xbf16>
    %c0_3 = arith.constant 0 : index
    %c0_4 = arith.constant 0 : index
    %3 = vector.load %arg2[%c0_3, %c0_4] : memref<128x128xbf16, #tpu.memory_space<vmem>>, vector<128x128xbf16>
    %cst = arith.constant dense<0.000000e+00> : vector<256x128xf32>
    %4 = tpu.matmul %2, %3, %cst {dimension_numbers = #tpu.dot_dimension_numbers<[1], [0], [0], [1], [0, 0, 1, 1], [], []>} : vector<256x128xbf16>, vector<128x128xbf16>, vector<256x128xf32> -> vector<256x128xf32>
    %c0_5 = arith.constant 0 : index
    %c0_6 = arith.constant 0 : index
    %5 = vector.load %arg3[%c0_5, %c0_6] : memref<1x128xf32, #tpu.memory_space<vmem>>, vector<1x128xf32>
    %6 = vector.broadcast %5 : vector<1x128xf32> to vector<256x128xf32>
    %7 = arith.addf %4, %6 : vector<256x128xf32>
    %8 = arith.negf %7 : vector<256x128xf32>
    %9 = math.exp %8 : vector<256x128xf32>
    %cst_7 = arith.constant 1.000000e+00 : f32
    %10 = vector.broadcast %cst_7 : f32 to vector<256x128xf32>
    %11 = arith.addf %10, %9 : vector<256x128xf32>
    %12 = arith.divf %10, %11 : vector<256x128xf32>
    %13 = arith.mulf %0, %12 : vector<256x128xf32>
    %14 = vector.broadcast %1 : vector<1x128xf32> to vector<256x128xf32>
    %15 = arith.mulf %13, %14 : vector<256x128xf32>
    %16 = arith.addf %15, %0 : vector<256x128xf32>
    %c0_8 = arith.constant 0 : index
    %c0_9 = arith.constant 0 : index
    %17 = vector.load %arg5[%c0_8, %c0_9] : memref<256x128xf32, #tpu.memory_space<vmem>>, vector<256x128xf32>
    tpu.vector_store %arg5[%c0_8, %c0_9], %16 {strides = array<i32>} : memref<256x128xf32, #tpu.memory_space<vmem>>, vector<256x128xf32>,
    return
  }
  func.func @transform_0(%arg0: i32) -> (i32, i32) {
    %c0_i32 = arith.constant 0 : i32
    %c0_i32_0 = arith.constant 0 : i32
    return %arg0, %c0_i32 : i32, i32
  }
  func.func @transform_1(%arg0: i32) -> (i32, i32) {
    %c0_i32 = arith.constant 0 : i32
    %c0_i32_0 = arith.constant 0 : i32
    %c0_i32_1 = arith.constant 0 : i32
    return %c0_i32, %c0_i32_0 : i32, i32
  }
  func.func @transform_2(%arg0: i32) -> (i32, i32) {
    %c0_i32 = arith.constant 0 : i32
    %c0_i32_0 = arith.constant 0 : i32
    %c0_i32_1 = arith.constant 0 : i32
    return %c0_i32, %c0_i32_0 : i32, i32
  }
  func.func @transform_3(%arg0: i32) -> (i32, i32) {
    %c0_i32 = arith.constant 0 : i32
    %c0_i32_0 = arith.constant 0 : i32
    %c0_i32_1 = arith.constant 0 : i32
    return %c0_i32, %c0_i32_0 : i32, i32
  }
  func.func @transform_4(%arg0: i32) -> (i32, i32) {
    %c0_i32 = arith.constant 0 : i32
    %c0_i32_0 = arith.constant 0 : i32
    return %arg0, %c0_i32 : i32, i32
  }
}

</mosaic_0001>

<llo_original>
// kernel: tpu_custom_call.1
$region0: #{tpu_custom_call.1}
  #allocation0 [shape = 'u32[]', space=smem, size = 0x4, offset = 0x4, fixed_abs, tag = 'smem constant byte address 0x4 - core index']
  #allocation1 [shape = 'u32[72,128]{1,0:T(1,128)}', space=vmem, size = 0x9000, scoped, tag = 'internal scratch']
  %s0 = inlined_call_operand.hbm [shape: f32[256,128], index: 0, kind: input, shape index: {}]
  %s1 = inlined_call_operand.hbm [shape: bf16[128,128], index: 1, kind: input, shape index: {}]
  %s2 = inlined_call_operand.hbm [shape: f32[1,128], index: 2, kind: input, shape index: {}]
  %s3 = inlined_call_operand.vmem [shape: f32[2,128], index: 3, kind: input, shape index: {}]
  %s4 = inlined_call_operand.hbm [shape: f32[256,128], index: 4, kind: output, shape index: {}]
  %s5 = sld [smem:[#allocation0]]
  $region38: #{tpu_custom_call.1} parent=0
    _
  %s7 = ssub.s32 1, %s5
  %s8 = scalar_select 0, %s7, %s5
  $region1: #{tpu_custom_call.1} parent=0
    #allocation2 [shape = 'u8[131072]{0}', space=vmem, size = 0x20000, scoped, tag = 'input window, operand 0, single buffered']
    #allocation3 [shape = 's32[1]{0}', space=sflag, size = 0x4, scoped, tag = 'scoped memory for tpu_custom_call.1']
    #allocation4 [shape = 's32[1]{0}', space=sflag, size = 0x4, scoped, tag = 'scoped memory for tpu_custom_call.1']
    #allocation5 [shape = 'u8[32768]{0}', space=vmem, size = 0x8000, scoped, tag = 'input window, operand 1, single buffered']
    #allocation6 [shape = 's32[1]{0}', space=sflag, size = 0x4, scoped, tag = 'scoped memory for tpu_custom_call.1']
    #allocation7 [shape = 'u8[512]{0}', space=vmem, size = 0x400, scoped, tag = 'input window, operand 2, single buffered']
    #allocation8 [shape = 'u8[131072]{0}', space=vmem, size = 0x20000, scoped, tag = 'output window, operand 0, single buffered']
    %9 = vsyncpa [#allocation3], 0
    %10 = vsyncpa [#allocation6], 0
    %11 = vsyncpa [#allocation4], 0
    // Predicated region
    $region2: #{tpu_custom_call.1} parent=1 // pred_check
      _
    $region3: #{tpu_custom_call.1} parent=1 // pred_check_branch
      %13 = sbr.rel (0) target = $region5
    $region4: #{tpu_custom_call.1} parent=1 // pred_region
      %15 = vsyncadd [#allocation3], 0
      %s16 = sshll.u32 %s0, 4
      %s17 = int_to_ptr.hbm [resolvable:$true] %s16
      %s18 = sshll.u32 [#allocation2], 4
      %s19 = int_to_ptr.vmem [resolvable:$true] %s18
      %24 = dma.hbm_to_vmem [thread:$0]  %s17, 4096, %s19, [#allocation3], 128, 128, 8
    $region5: #{tpu_custom_call.1} parent=1 // pred_fallthru
      _
    // Predicated region
    $region6: #{tpu_custom_call.1} parent=1 // pred_check
      _
    $region7: #{tpu_custom_call.1} parent=1 // pred_check_branch
      %26 = sbr.rel (0) target = $region9
    $region8: #{tpu_custom_call.1} parent=1 // pred_region
      %28 = vsyncadd [#allocation6], 0
      %s29 = sshll.u32 %s1, 4
      %s30 = int_to_ptr.hbm [resolvable:$true] %s29
      %s31 = sshll.u32 [#allocation5], 4
      %s32 = int_to_ptr.vmem [resolvable:$true] %s31
      %37 = dma.hbm_to_vmem [thread:$0]  %s30, 1024, %s32, [#allocation6], 64, 64, 4
    $region9: #{tpu_custom_call.1} parent=1 // pred_fallthru
      _
    // Predicated region
    $region10: #{tpu_custom_call.1} parent=1 // pred_check
      _
    $region11: #{tpu_custom_call.1} parent=1 // pred_check_branch
      %39 = sbr.rel (0) target = $region13
    $region12: #{tpu_custom_call.1} parent=1 // pred_region
      %41 = vsyncadd [#allocation6], 0
      %s43 = sshll.u32 %s2, 4
      %s44 = int_to_ptr.hbm [resolvable:$true] %s43
      %s45 = sshll.u32 [#allocation7], 4
      %s46 = int_to_ptr.vmem [resolvable:$true] %s45
      %48 = dma.hbm_to_vmem [thread:$0]  %s44, 16, %s46, [#allocation6]
    $region13: #{tpu_custom_call.1} parent=1 // pred_fallthru
      _
    // Predicated region
    $region14: #{tpu_custom_call.1} parent=1 // pred_check
      _
    $region15: #{tpu_custom_call.1} parent=1 // pred_check_branch
      %50 = sbr.rel (0) target = $region17
    $region16: #{tpu_custom_call.1} parent=1 // pred_region
      _
    $region17: #{tpu_custom_call.1} parent=1 // pred_fallthru
      _
    // Predicated region
    $region18: #{tpu_custom_call.1} parent=1 // pred_check
      _
    $region19: #{tpu_custom_call.1} parent=1 // pred_check_branch
      %52 = sbr.rel (0) target = $region21
    $region20: #{tpu_custom_call.1} parent=1 // pred_region
      %54 = dma.done [#allocation3], 4096
    $region21: #{tpu_custom_call.1} parent=1 // pred_fallthru
      _
    // Predicated region
    $region22: #{tpu_custom_call.1} parent=1 // pred_check
      _
    $region23: #{tpu_custom_call.1} parent=1 // pred_check_branch
      %56 = sbr.rel (0) target = $region25
    $region24: #{tpu_custom_call.1} parent=1 // pred_region
      %58 = dma.done [#allocation6], 1024
    $region25: #{tpu_custom_call.1} parent=1 // pred_fallthru
      _
    // Predicated region
    $region26: #{tpu_custom_call.1} parent=1 // pred_check
      _
    $region27: #{tpu_custom_call.1} parent=1 // pred_check_branch
      %60 = sbr.rel (0) target = $region29
    $region28: #{tpu_custom_call.1} parent=1 // pred_region
      %62 = dma.done [#allocation6], 16
    $region29: #{tpu_custom_call.1} parent=1 // pred_fallthru
      _
    %v63 = vld [vmem:[#allocation2] sm:$0xff]
    %v64 = vld [vmem:[#allocation2 + $0x8] sm:$0xff]
    %v65 = vld [vmem:[#allocation2 + $0x10] sm:$0xff]
    %v66 = vld [vmem:[#allocation2 + $0x18] sm:$0xff]
    %v67 = vld [vmem:[#allocation2 + $0x20] sm:$0xff]
    %v68 = vld [vmem:[#allocation2 + $0x28] sm:$0xff]
    %v69 = vld [vmem:[#allocation2 + $0x30] sm:$0xff]
    %v70 = vld [vmem:[#allocation2 + $0x38] sm:$0xff]
    %v71 = vld [vmem:[#allocation2 + $0x40] sm:$0xff]
    %v72 = vld [vmem:[#allocation2 + $0x48] sm:$0xff]
    %v73 = vld [vmem:[#allocation2 + $0x50] sm:$0xff]
    %v74 = vld [vmem:[#allocation2 + $0x58] sm:$0xff]
    %v75 = vld [vmem:[#allocation2 + $0x60] sm:$0xff]
    %v76 = vld [vmem:[#allocation2 + $0x68] sm:$0xff]
    %v77 = vld [vmem:[#allocation2 + $0x70] sm:$0xff]
    %v78 = vld [vmem:[#allocation2 + $0x78] sm:$0xff]
    %v79 = vld [vmem:[#allocation2 + $0x80] sm:$0xff]
    %v80 = vld [vmem:[#allocation2 + $0x88] sm:$0xff]
    %v81 = vld [vmem:[#allocation2 + $0x90] sm:$0xff]
    %v82 = vld [vmem:[#allocation2 + $0x98] sm:$0xff]
    %v83 = vld [vmem:[#allocation2 + $0xa0] sm:$0xff]
    %v84 = vld [vmem:[#allocation2 + $0xa8] sm:$0xff]
    %v85 = vld [vmem:[#allocation2 + $0xb0] sm:$0xff]
    %v86 = vld [vmem:[#allocation2 + $0xb8] sm:$0xff]
    %v87 = vld [vmem:[#allocation2 + $0xc0] sm:$0xff]
    %v88 = vld [vmem:[#allocation2 + $0xc8] sm:$0xff]
    %v89 = vld [vmem:[#allocation2 + $0xd0] sm:$0xff]
    %v90 = vld [vmem:[#allocation2 + $0xd8] sm:$0xff]
    %v91 = vld [vmem:[#allocation2 + $0xe0] sm:$0xff]
    %v92 = vld [vmem:[#allocation2 + $0xe8] sm:$0xff]
    %v93 = vld [vmem:[#allocation2 + $0xf0] sm:$0xff]
    %v94 = vld [vmem:[#allocation2 + $0xf8] sm:$0xff]
    %v95 = vld [vmem:[%s3] sm:$0x1]
    %v96 = vpack.c.bf16 %v64, %v63
    %v97 = vpack.c.bf16 %v66, %v65
    %v98 = vpack.c.bf16 %v68, %v67
    %v99 = vpack.c.bf16 %v70, %v69
    %v100 = vpack.c.bf16 %v72, %v71
    %v101 = vpack.c.bf16 %v74, %v73
    %v102 = vpack.c.bf16 %v76, %v75
    %v103 = vpack.c.bf16 %v78, %v77
    %v104 = vpack.c.bf16 %v80, %v79
    %v105 = vpack.c.bf16 %v82, %v81
    %v106 = vpack.c.bf16 %v84, %v83
    %v107 = vpack.c.bf16 %v86, %v85
    %v108 = vpack.c.bf16 %v88, %v87
    %v109 = vpack.c.bf16 %v90, %v89
    %v110 = vpack.c.bf16 %v92, %v91
    %v111 = vpack.c.bf16 %v94, %v93
    %v112 = vld [vmem:[#allocation5] sm:$0xf]
    %v113 = vld [vmem:[#allocation5 + $0x4] sm:$0xf]
    %v114 = vld [vmem:[#allocation5 + $0x8] sm:$0xf]
    %v115 = vld [vmem:[#allocation5 + $0xc] sm:$0xf]
    %v116 = vld [vmem:[#allocation5 + $0x10] sm:$0xf]
    %v117 = vld [vmem:[#allocation5 + $0x14] sm:$0xf]
    %v118 = vld [vmem:[#allocation5 + $0x18] sm:$0xf]
    %v119 = vld [vmem:[#allocation5 + $0x1c] sm:$0xf]
    %v120 = vld [vmem:[#allocation5 + $0x20] sm:$0xf]
    %v121 = vld [vmem:[#allocation5 + $0x24] sm:$0xf]
    %v122 = vld [vmem:[#allocation5 + $0x28] sm:$0xf]
    %v123 = vld [vmem:[#allocation5 + $0x2c] sm:$0xf]
    %v124 = vld [vmem:[#allocation5 + $0x30] sm:$0xf]
    %v125 = vld [vmem:[#allocation5 + $0x34] sm:$0xf]
    %v126 = vld [vmem:[#allocation5 + $0x38] sm:$0xf]
    %v127 = vld [vmem:[#allocation5 + $0x3c] sm:$0xf]
    %v128 = vld [vmem:[#allocation7] sm:$0x1]
    %v130 = vperm.slane %v128, 0
    %v148 = vunpack.c.l.b16 %v112
    %v149 = vunpack.c.l.b16 %v113
    %v150 = vunpack.c.l.b16 %v114
    %v151 = vunpack.c.l.b16 %v115
    %v152 = vunpack.c.l.b16 %v116
    %v153 = vunpack.c.l.b16 %v117
    %v154 = vunpack.c.l.b16 %v118
    %v155 = vunpack.c.l.b16 %v119
    %v156 = vunpack.c.l.b16 %v120
    %v157 = vunpack.c.l.b16 %v121
    %v158 = vunpack.c.l.b16 %v122
    %v159 = vunpack.c.l.b16 %v123
    %v160 = vunpack.c.l.b16 %v124
    %v161 = vunpack.c.l.b16 %v125
    %v162 = vunpack.c.l.b16 %v126
    %v163 = vunpack.c.l.b16 %v127
    %v164 = vpack.c.b16 %v149, %v148
    %v165 = vpack.c.b16 %v151, %v150
    %v166 = vpack.c.b16 %v153, %v152
    %v167 = vpack.c.b16 %v155, %v154
    %v168 = vpack.c.b16 %v157, %v156
    %v169 = vpack.c.b16 %v159, %v158
    %v170 = vpack.c.b16 %v161, %v160
    %v171 = vpack.c.b16 %v163, %v162
    %180 = vmatpush.bf16.msra.mxu0 %v171
    %181 = vmatpush.bf16.msra.mxu0 %v170
    %182 = vmatpush.bf16.msra.mxu0 %v169
    %183 = vmatpush.bf16.msra.mxu0 %v168
    %184 = vmatpush.bf16.msra.mxu0 %v167
    %185 = vmatpush.bf16.msra.mxu0 %v166
    %186 = vmatpush.bf16.msra.mxu0 %v165
    %187 = vmatpush.bf16.msra.mxu0 %v164
    %188 = vmatmul.bf16.gmra.mxu0 %v96
    %v189 = vpop.f32.mrf.mxu0
    %v190 = vadd.f32 %v130, %v189
    %v191 = vpop.f32.mrf.mxu0
    %v192 = vadd.f32 %v130, %v191
    %193 = vmatmul.bf16.gmra.mxu0 %v97
    %v194 = vpop.f32.mrf.mxu0
    %v195 = vadd.f32 %v130, %v194
    %v196 = vpop.f32.mrf.mxu0
    %v197 = vadd.f32 %v130, %v196
    %198 = vmatmul.bf16.gmra.mxu0 %v98
    %v199 = vpop.f32.mrf.mxu0
    %v200 = vadd.f32 %v130, %v199
    %v201 = vpop.f32.mrf.mxu0
    %v202 = vadd.f32 %v130, %v201
    %203 = vmatmul.bf16.gmra.mxu0 %v99
    %v204 = vpop.f32.mrf.mxu0
    %v205 = vadd.f32 %v130, %v204
    %v206 = vpop.f32.mrf.mxu0
    %v207 = vadd.f32 %v130, %v206
    %208 = vmatmul.bf16.gmra.mxu0 %v100
    %v209 = vpop.f32.mrf.mxu0
    %v210 = vadd.f32 %v130, %v209
    %v211 = vpop.f32.mrf.mxu0
    %v212 = vadd.f32 %v130, %v211
    %213 = vmatmul.bf16.gmra.mxu0 %v101
    %v214 = vpop.f32.mrf.mxu0
    %v215 = vadd.f32 %v130, %v214
    %v216 = vpop.f32.mrf.mxu0
    %v217 = vadd.f32 %v130, %v216
    %218 = vmatmul.bf16.gmra.mxu0 %v102
    %v219 = vpop.f32.mrf.mxu0
    %v220 = vadd.f32 %v130, %v219
    %v221 = vpop.f32.mrf.mxu0
    %v222 = vadd.f32 %v130, %v221
    %223 = vmatmul.bf16.gmra.mxu0 %v103
    %v224 = vpop.f32.mrf.mxu0
    %v225 = vadd.f32 %v130, %v224
    %v226 = vpop.f32.mrf.mxu0
    %v227 = vadd.f32 %v130, %v226
    %228 = vmatmul.bf16.gmra.mxu0 %v104
    %v229 = vpop.f32.mrf.mxu0
    %v230 = vadd.f32 %v130, %v229
    %v231 = vpop.f32.mrf.mxu0
    %v232 = vadd.f32 %v130, %v231
    %233 = vmatmul.bf16.gmra.mxu0 %v105
    %v234 = vpop.f32.mrf.mxu0
    %v235 = vadd.f32 %v130, %v234
    %v236 = vpop.f32.mrf.mxu0
    %v237 = vadd.f32 %v130, %v236
    %238 = vmatmul.bf16.gmra.mxu0 %v106
    %v239 = vpop.f32.mrf.mxu0
    %v240 = vadd.f32 %v130, %v239
    %v241 = vpop.f32.mrf.mxu0
    %v242 = vadd.f32 %v130, %v241
    %243 = vmatmul.bf16.gmra.mxu0 %v107
    %v244 = vpop.f32.mrf.mxu0
    %v245 = vadd.f32 %v130, %v244
    %v246 = vpop.f32.mrf.mxu0
    %v247 = vadd.f32 %v130, %v246
    %248 = vmatmul.bf16.gmra.mxu0 %v108
    %v249 = vpop.f32.mrf.mxu0
    %v250 = vadd.f32 %v130, %v249
    %v251 = vpop.f32.mrf.mxu0
    %v252 = vadd.f32 %v130, %v251
    %253 = vmatmul.bf16.gmra.mxu0 %v109
    %v254 = vpop.f32.mrf.mxu0
    %v255 = vadd.f32 %v130, %v254
    %v256 = vpop.f32.mrf.mxu0
    %v257 = vadd.f32 %v130, %v256
    %258 = vmatmul.bf16.gmra.mxu0 %v110
    %v259 = vpop.f32.mrf.mxu0
    %v260 = vadd.f32 %v130, %v259
    %v261 = vpop.f32.mrf.mxu0
    %v262 = vadd.f32 %v130, %v261
    %263 = vmatmul.bf16.gmra.mxu0 %v111
    %v264 = vpop.f32.mrf.mxu0
    %v265 = vadd.f32 %v130, %v264
    %v266 = vpop.f32.mrf.mxu0
    %v267 = vadd.f32 %v130, %v266
    %268 = vdwg.mxu0
    %v269 = vxor.u32 %v190, 2147483648
    %v270 = vxor.u32 %v192, 2147483648
    %v271 = vxor.u32 %v195, 2147483648
    %v272 = vxor.u32 %v197, 2147483648
    %v273 = vxor.u32 %v200, 2147483648
    %v274 = vxor.u32 %v202, 2147483648
    %v275 = vxor.u32 %v205, 2147483648
    %v276 = vxor.u32 %v207, 2147483648
    %v277 = vxor.u32 %v210, 2147483648
    %v278 = vxor.u32 %v212, 2147483648
    %v279 = vxor.u32 %v215, 2147483648
    %v280 = vxor.u32 %v217, 2147483648
    %v281 = vxor.u32 %v220, 2147483648
    %v282 = vxor.u32 %v222, 2147483648
    %v283 = vxor.u32 %v225, 2147483648
    %v284 = vxor.u32 %v227, 2147483648
    %v285 = vxor.u32 %v230, 2147483648
    %v286 = vxor.u32 %v232, 2147483648
    %v287 = vxor.u32 %v235, 2147483648
    %v288 = vxor.u32 %v237, 2147483648
    %v289 = vxor.u32 %v240, 2147483648
    %v290 = vxor.u32 %v242, 2147483648
    %v291 = vxor.u32 %v245, 2147483648
    %v292 = vxor.u32 %v247, 2147483648
    %v293 = vxor.u32 %v250, 2147483648
    %v294 = vxor.u32 %v252, 2147483648
    %v295 = vxor.u32 %v255, 2147483648
    %v296 = vxor.u32 %v257, 2147483648
    %v297 = vxor.u32 %v260, 2147483648
    %v298 = vxor.u32 %v262, 2147483648
    %v299 = vxor.u32 %v265, 2147483648
    %v300 = vxor.u32 %v267, 2147483648
    %v301 = vmul.f32 %v269, 1.442695
    %v302 = vpow.pop %v301
    %v303 = vmul.f32 %v270, 1.442695
    %v304 = vpow.pop %v303
    %v305 = vmul.f32 %v271, 1.442695
    %v306 = vpow.pop %v305
    %v307 = vmul.f32 %v272, 1.442695
    %v308 = vpow.pop %v307
    %v309 = vmul.f32 %v273, 1.442695
    %v310 = vpow.pop %v309
    %v311 = vmul.f32 %v274, 1.442695
    %v312 = vpow.pop %v311
    %v313 = vmul.f32 %v275, 1.442695
    %v314 = vpow.pop %v313
    %v315 = vmul.f32 %v276, 1.442695
    %v316 = vpow.pop %v315
    %v317 = vmul.f32 %v277, 1.442695
    %v318 = vpow.pop %v317
    %v319 = vmul.f32 %v278, 1.442695
    %v320 = vpow.pop %v319
    %v321 = vmul.f32 %v279, 1.442695
    %v322 = vpow.pop %v321
    %v323 = vmul.f32 %v280, 1.442695
    %v324 = vpow.pop %v323
    %v325 = vmul.f32 %v281, 1.442695
    %v326 = vpow.pop %v325
    %v327 = vmul.f32 %v282, 1.442695
    %v328 = vpow.pop %v327
    %v329 = vmul.f32 %v283, 1.442695
    %v330 = vpow.pop %v329
    %v331 = vmul.f32 %v284, 1.442695
    %v332 = vpow.pop %v331
    %v333 = vmul.f32 %v285, 1.442695
    %v334 = vpow.pop %v333
    %v335 = vmul.f32 %v286, 1.442695
    %v336 = vpow.pop %v335
    %v337 = vmul.f32 %v287, 1.442695
    %v338 = vpow.pop %v337
    %v339 = vmul.f32 %v288, 1.442695
    %v340 = vpow.pop %v339
    %v341 = vmul.f32 %v289, 1.442695
    %v342 = vpow.pop %v341
    %v343 = vmul.f32 %v290, 1.442695
    %v344 = vpow.pop %v343
    %v345 = vmul.f32 %v291, 1.442695
    %v346 = vpow.pop %v345
    %v347 = vmul.f32 %v292, 1.442695
    %v348 = vpow.pop %v347
    %v349 = vmul.f32 %v293, 1.442695
    %v350 = vpow.pop %v349
    %v351 = vmul.f32 %v294, 1.442695
    %v352 = vpow.pop %v351
    %v353 = vmul.f32 %v295, 1.442695
    %v354 = vpow.pop %v353
    %v355 = vmul.f32 %v296, 1.442695
    %v356 = vpow.pop %v355
    %v357 = vmul.f32 %v297, 1.442695
    %v358 = vpow.pop %v357
    %v359 = vmul.f32 %v298, 1.442695
    %v360 = vpow.pop %v359
    %v361 = vmul.f32 %v299, 1.442695
    %v362 = vpow.pop %v361
    %v363 = vmul.f32 %v300, 1.442695
    %v364 = vpow.pop %v363
    %v365 = vadd.f32 %v302, 1.0
    %v366 = vadd.f32 %v304, 1.0
    %v367 = vadd.f32 %v306, 1.0
    %v368 = vadd.f32 %v308, 1.0
    %v369 = vadd.f32 %v310, 1.0
    %v370 = vadd.f32 %v312, 1.0
    %v371 = vadd.f32 %v314, 1.0
    %v372 = vadd.f32 %v316, 1.0
    %v373 = vadd.f32 %v318, 1.0
    %v374 = vadd.f32 %v320, 1.0
    %v375 = vadd.f32 %v322, 1.0
    %v376 = vadd.f32 %v324, 1.0
    %v377 = vadd.f32 %v326, 1.0
    %v378 = vadd.f32 %v328, 1.0
    %v379 = vadd.f32 %v330, 1.0
    %v380 = vadd.f32 %v332, 1.0
    %v381 = vadd.f32 %v334, 1.0
    %v382 = vadd.f32 %v336, 1.0
    %v383 = vadd.f32 %v338, 1.0
    %v384 = vadd.f32 %v340, 1.0
    %v385 = vadd.f32 %v342, 1.0
    %v386 = vadd.f32 %v344, 1.0
    %v387 = vadd.f32 %v346, 1.0
    %v388 = vadd.f32 %v348, 1.0
    %v389 = vadd.f32 %v350, 1.0
    %v390 = vadd.f32 %v352, 1.0
    %v391 = vadd.f32 %v354, 1.0
    %v392 = vadd.f32 %v356, 1.0
    %v393 = vadd.f32 %v358, 1.0
    %v394 = vadd.f32 %v360, 1.0
    %v395 = vadd.f32 %v362, 1.0
    %v396 = vadd.f32 %v364, 1.0
    %v397 = vrcp.pop %v365
    %v398 = vmul.f32 %v365, %v397
    %v399 = vsub.f32 1.0, %v398
    %v400 = vmul.f32 %v397, %v399
    %v401 = vadd.f32 %v397, %v400
    %vm402 = vweird.f32 %v365
    %vm403 = vweird.f32 %v397
    %vm404 = vmor %vm402, %vm403
    %v405 = vsel %vm404, %v397, %v401
    %v406 = vand.u32 2147483647, %v365
    %vm407 = vcmp.eq.f32.partialorder %v406, 8.507059e+37
    %v408 = vand.u32 %v365, 2147483648
    %v409 = vor.u32 1.1754944e-38, %v408
    %v410 = vsel %vm407, %v409, %v405
    %v411 = vmul.f32 1.0, %v410
    %v412 = vrcp.pop %v366
    %v413 = vmul.f32 %v366, %v412
    %v414 = vsub.f32 1.0, %v413
    %v415 = vmul.f32 %v412, %v414
    %v416 = vadd.f32 %v412, %v415
    %vm417 = vweird.f32 %v366
    %vm418 = vweird.f32 %v412
    %vm419 = vmor %vm417, %vm418
    %v420 = vsel %vm419, %v412, %v416
    %v421 = vand.u32 2147483647, %v366
    %vm422 = vcmp.eq.f32.partialorder %v421, 8.507059e+37
    %v423 = vand.u32 %v366, 2147483648
    %v424 = vor.u32 1.1754944e-38, %v423
    %v425 = vsel %vm422, %v424, %v420
    %v426 = vmul.f32 1.0, %v425
    %v427 = vrcp.pop %v367
    %v428 = vmul.f32 %v367, %v427
    %v429 = vsub.f32 1.0, %v428
    %v430 = vmul.f32 %v427, %v429
    %v431 = vadd.f32 %v427, %v430
    %vm432 = vweird.f32 %v367
    %vm433 = vweird.f32 %v427
    %vm434 = vmor %vm432, %vm433
    %v435 = vsel %vm434, %v427, %v431
    %v436 = vand.u32 2147483647, %v367
    %vm437 = vcmp.eq.f32.partialorder %v436, 8.507059e+37
    %v438 = vand.u32 %v367, 2147483648
    %v439 = vor.u32 1.1754944e-38, %v438
    %v440 = vsel %vm437, %v439, %v435
    %v441 = vmul.f32 1.0, %v440
    %v442 = vrcp.pop %v368
    %v443 = vmul.f32 %v368, %v442
    %v444 = vsub.f32 1.0, %v443
    %v445 = vmul.f32 %v442, %v444
    %v446 = vadd.f32 %v442, %v445
    %vm447 = vweird.f32 %v368
    %vm448 = vweird.f32 %v442
    %vm449 = vmor %vm447, %vm448
    %v450 = vsel %vm449, %v442, %v446
    %v451 = vand.u32 2147483647, %v368
    %vm452 = vcmp.eq.f32.partialorder %v451, 8.507059e+37
    %v453 = vand.u32 %v368, 2147483648
    %v454 = vor.u32 1.1754944e-38, %v453
    %v455 = vsel %vm452, %v454, %v450
    %v456 = vmul.f32 1.0, %v455
    %v457 = vrcp.pop %v369
    %v458 = vmul.f32 %v369, %v457
    %v459 = vsub.f32 1.0, %v458
    %v460 = vmul.f32 %v457, %v459
    %v461 = vadd.f32 %v457, %v460
    %vm462 = vweird.f32 %v369
    %vm463 = vweird.f32 %v457
    %vm464 = vmor %vm462, %vm463
    %v465 = vsel %vm464, %v457, %v461
    %v466 = vand.u32 2147483647, %v369
    %vm467 = vcmp.eq.f32.partialorder %v466, 8.507059e+37
    %v468 = vand.u32 %v369, 2147483648
    %v469 = vor.u32 1.1754944e-38, %v468
    %v470 = vsel %vm467, %v469, %v465
    %v471 = vmul.f32 1.0, %v470
    %v472 = vrcp.pop %v370
    %v473 = vmul.f32 %v370, %v472
    %v474 = vsub.f32 1.0, %v473
    %v475 = vmul.f32 %v472, %v474
    %v476 = vadd.f32 %v472, %v475
    %vm477 = vweird.f32 %v370
    %vm478 = vweird.f32 %v472
    %vm479 = vmor %vm477, %vm478
    %v480 = vsel %vm479, %v472, %v476
    %v481 = vand.u32 2147483647, %v370
    %vm482 = vcmp.eq.f32.partialorder %v481, 8.507059e+37
    %v483 = vand.u32 %v370, 2147483648
    %v484 = vor.u32 1.1754944e-38, %v483
    %v485 = vsel %vm482, %v484, %v480
    %v486 = vmul.f32 1.0, %v485
    %v487 = vrcp.pop %v371
    %v488 = vmul.f32 %v371, %v487
    %v489 = vsub.f32 1.0, %v488
    %v490 = vmul.f32 %v487, %v489
    %v491 = vadd.f32 %v487, %v490
    %vm492 = vweird.f32 %v371
    %vm493 = vweird.f32 %v487
    %vm494 = vmor %vm492, %vm493
    %v495 = vsel %vm494, %v487, %v491
    %v496 = vand.u32 2147483647, %v371
    %vm497 = vcmp.eq.f32.partialorder %v496, 8.507059e+37
    %v498 = vand.u32 %v371, 2147483648
    %v499 = vor.u32 1.1754944e-38, %v498
    %v500 = vsel %vm497, %v499, %v495
    %v501 = vmul.f32 1.0, %v500
    %v502 = vrcp.pop %v372
    %v503 = vmul.f32 %v372, %v502
    %v504 = vsub.f32 1.0, %v503
    %v505 = vmul.f32 %v502, %v504
    %v506 = vadd.f32 %v502, %v505
    %vm507 = vweird.f32 %v372
    %vm508 = vweird.f32 %v502
    %vm509 = vmor %vm507, %vm508
    %v510 = vsel %vm509, %v502, %v506
    %v511 = vand.u32 2147483647, %v372
    %vm512 = vcmp.eq.f32.partialorder %v511, 8.507059e+37
    %v513 = vand.u32 %v372, 2147483648
    %v514 = vor.u32 1.1754944e-38, %v513
    %v515 = vsel %vm512, %v514, %v510
    %v516 = vmul.f32 1.0, %v515
    %v517 = vrcp.pop %v373
    %v518 = vmul.f32 %v373, %v517
    %v519 = vsub.f32 1.0, %v518
    %v520 = vmul.f32 %v517, %v519
    %v521 = vadd.f32 %v517, %v520
    %vm522 = vweird.f32 %v373
    %vm523 = vweird.f32 %v517
    %vm524 = vmor %vm522, %vm523
    %v525 = vsel %vm524, %v517, %v521
    %v526 = vand.u32 2147483647, %v373
    %vm527 = vcmp.eq.f32.partialorder %v526, 8.507059e+37
    %v528 = vand.u32 %v373, 2147483648
    %v529 = vor.u32 1.1754944e-38, %v528
    %v530 = vsel %vm527, %v529, %v525
    %v531 = vmul.f32 1.0, %v530
    %v532 = vrcp.pop %v374
    %v533 = vmul.f32 %v374, %v532
    %v534 = vsub.f32 1.0, %v533
    %v535 = vmul.f32 %v532, %v534
    %v536 = vadd.f32 %v532, %v535
    %vm537 = vweird.f32 %v374
    %vm538 = vweird.f32 %v532
    %vm539 = vmor %vm537, %vm538
    %v540 = vsel %vm539, %v532, %v536
    %v541 = vand.u32 2147483647, %v374
    %vm542 = vcmp.eq.f32.partialorder %v541, 8.507059e+37
    %v543 = vand.u32 %v374, 2147483648
    %v544 = vor.u32 1.1754944e-38, %v543
    %v545 = vsel %vm542, %v544, %v540
    %v546 = vmul.f32 1.0, %v545
    %v547 = vrcp.pop %v375
    %v548 = vmul.f32 %v375, %v547
    %v549 = vsub.f32 1.0, %v548
    %v550 = vmul.f32 %v547, %v549
    %v551 = vadd.f32 %v547, %v550
    %vm552 = vweird.f32 %v375
    %vm553 = vweird.f32 %v547
    %vm554 = vmor %vm552, %vm553
    %v555 = vsel %vm554, %v547, %v551
    %v556 = vand.u32 2147483647, %v375
    %vm557 = vcmp.eq.f32.partialorder %v556, 8.507059e+37
    %v558 = vand.u32 %v375, 2147483648
    %v559 = vor.u32 1.1754944e-38, %v558
    %v560 = vsel %vm557, %v559, %v555
    %v561 = vmul.f32 1.0, %v560
    %v562 = vrcp.pop %v376
    %v563 = vmul.f32 %v376, %v562
    %v564 = vsub.f32 1.0, %v563
    %v565 = vmul.f32 %v562, %v564
    %v566 = vadd.f32 %v562, %v565
    %vm567 = vweird.f32 %v376
    %vm568 = vweird.f32 %v562
    %vm569 = vmor %vm567, %vm568
    %v570 = vsel %vm569, %v562, %v566
    %v571 = vand.u32 2147483647, %v376
    %vm572 = vcmp.eq.f32.partialorder %v571, 8.507059e+37
    %v573 = vand.u32 %v376, 2147483648
    %v574 = vor.u32 1.1754944e-38, %v573
    %v575 = vsel %vm572, %v574, %v570
    %v576 = vmul.f32 1.0, %v575
    %v577 = vrcp.pop %v377
    %v578 = vmul.f32 %v377, %v577
    %v579 = vsub.f32 1.0, %v578
    %v580 = vmul.f32 %v577, %v579
    %v581 = vadd.f32 %v577, %v580
    %vm582 = vweird.f32 %v377
    %vm583 = vweird.f32 %v577
    %vm584 = vmor %vm582, %vm583
    %v585 = vsel %vm584, %v577, %v581
    %v586 = vand.u32 2147483647, %v377
    %vm587 = vcmp.eq.f32.partialorder %v586, 8.507059e+37
    %v588 = vand.u32 %v377, 2147483648
    %v589 = vor.u32 1.1754944e-38, %v588
    %v590 = vsel %vm587, %v589, %v585
    %v591 = vmul.f32 1.0, %v590
    %v592 = vrcp.pop %v378
    %v593 = vmul.f32 %v378, %v592
    %v594 = vsub.f32 1.0, %v593
    %v595 = vmul.f32 %v592, %v594
    %v596 = vadd.f32 %v592, %v595
    %vm597 = vweird.f32 %v378
    %vm598 = vweird.f32 %v592
    %vm599 = vmor %vm597, %vm598
    %v600 = vsel %vm599, %v592, %v596
    %v601 = vand.u32 2147483647, %v378
    %vm602 = vcmp.eq.f32.partialorder %v601, 8.507059e+37
    %v603 = vand.u32 %v378, 2147483648
    %v604 = vor.u32 1.1754944e-38, %v603
    %v605 = vsel %vm602, %v604, %v600
    %v606 = vmul.f32 1.0, %v605
    %v607 = vrcp.pop %v379
    %v608 = vmul.f32 %v379, %v607
    %v609 = vsub.f32 1.0, %v608
    %v610 = vmul.f32 %v607, %v609
    %v611 = vadd.f32 %v607, %v610
    %vm612 = vweird.f32 %v379
    %vm613 = vweird.f32 %v607
    %vm614 = vmor %vm612, %vm613
    %v615 = vsel %vm614, %v607, %v611
    %v616 = vand.u32 2147483647, %v379
    %vm617 = vcmp.eq.f32.partialorder %v616, 8.507059e+37
    %v618 = vand.u32 %v379, 2147483648
    %v619 = vor.u32 1.1754944e-38, %v618
    %v620 = vsel %vm617, %v619, %v615
    %v621 = vmul.f32 1.0, %v620
    %v622 = vrcp.pop %v380
    %v623 = vmul.f32 %v380, %v622
    %v624 = vsub.f32 1.0, %v623
    %v625 = vmul.f32 %v622, %v624
    %v626 = vadd.f32 %v622, %v625
    %vm627 = vweird.f32 %v380
    %vm628 = vweird.f32 %v622
    %vm629 = vmor %vm627, %vm628
    %v630 = vsel %vm629, %v622, %v626
    %v631 = vand.u32 2147483647, %v380
    %vm632 = vcmp.eq.f32.partialorder %v631, 8.507059e+37
    %v633 = vand.u32 %v380, 2147483648
    %v634 = vor.u32 1.1754944e-38, %v633
    %v635 = vsel %vm632, %v634, %v630
    %v636 = vmul.f32 1.0, %v635
    %v637 = vrcp.pop %v381
    %v638 = vmul.f32 %v381, %v637
    %v639 = vsub.f32 1.0, %v638
    %v640 = vmul.f32 %v637, %v639
    %v641 = vadd.f32 %v637, %v640
    %vm642 = vweird.f32 %v381
    %vm643 = vweird.f32 %v637
    %vm644 = vmor %vm642, %vm643
    %v645 = vsel %vm644, %v637, %v641
    %v646 = vand.u32 2147483647, %v381
    %vm647 = vcmp.eq.f32.partialorder %v646, 8.507059e+37
    %v648 = vand.u32 %v381, 2147483648
    %v649 = vor.u32 1.1754944e-38, %v648
    %v650 = vsel %vm647, %v649, %v645
    %v651 = vmul.f32 1.0, %v650
    %v652 = vrcp.pop %v382
    %v653 = vmul.f32 %v382, %v652
    %v654 = vsub.f32 1.0, %v653
    %v655 = vmul.f32 %v652, %v654
    %v656 = vadd.f32 %v652, %v655
    %vm657 = vweird.f32 %v382
    %vm658 = vweird.f32 %v652
    %vm659 = vmor %vm657, %vm658
    %v660 = vsel %vm659, %v652, %v656
    %v661 = vand.u32 2147483647, %v382
    %vm662 = vcmp.eq.f32.partialorder %v661, 8.507059e+37
    %v663 = vand.u32 %v382, 2147483648
    %v664 = vor.u32 1.1754944e-38, %v663
    %v665 = vsel %vm662, %v664, %v660
    %v666 = vmul.f32 1.0, %v665
    %v667 = vrcp.pop %v383
    %v668 = vmul.f32 %v383, %v667
    %v669 = vsub.f32 1.0, %v668
    %v670 = vmul.f32 %v667, %v669
    %v671 = vadd.f32 %v667, %v670
    %vm672 = vweird.f32 %v383
    %vm673 = vweird.f32 %v667
    %vm674 = vmor %vm672, %vm673
    %v675 = vsel %vm674, %v667, %v671
    %v676 = vand.u32 2147483647, %v383
    %vm677 = vcmp.eq.f32.partialorder %v676, 8.507059e+37
    %v678 = vand.u32 %v383, 2147483648
    %v679 = vor.u32 1.1754944e-38, %v678
    %v680 = vsel %vm677, %v679, %v675
    %v681 = vmul.f32 1.0, %v680
    %v682 = vrcp.pop %v384
    %v683 = vmul.f32 %v384, %v682
    %v684 = vsub.f32 1.0, %v683
    %v685 = vmul.f32 %v682, %v684
    %v686 = vadd.f32 %v682, %v685
    %vm687 = vweird.f32 %v384
    %vm688 = vweird.f32 %v682
    %vm689 = vmor %vm687, %vm688
    %v690 = vsel %vm689, %v682, %v686
    %v691 = vand.u32 2147483647, %v384
    %vm692 = vcmp.eq.f32.partialorder %v691, 8.507059e+37
    %v693 = vand.u32 %v384, 2147483648
    %v694 = vor.u32 1.1754944e-38, %v693
    %v695 = vsel %vm692, %v694, %v690
    %v696 = vmul.f32 1.0, %v695
    %v697 = vrcp.pop %v385
    %v698 = vmul.f32 %v385, %v697
    %v699 = vsub.f32 1.0, %v698
    %v700 = vmul.f32 %v697, %v699
    %v701 = vadd.f32 %v697, %v700
    %vm702 = vweird.f32 %v385
    %vm703 = vweird.f32 %v697
    %vm704 = vmor %vm702, %vm703
    %v705 = vsel %vm704, %v697, %v701
    %v706 = vand.u32 2147483647, %v385
    %vm707 = vcmp.eq.f32.partialorder %v706, 8.507059e+37
    %v708 = vand.u32 %v385, 2147483648
    %v709 = vor.u32 1.1754944e-38, %v708
    %v710 = vsel %vm707, %v709, %v705
    %v711 = vmul.f32 1.0, %v710
    %v712 = vrcp.pop %v386
    %v713 = vmul.f32 %v386, %v712
    %v714 = vsub.f32 1.0, %v713
    %v715 = vmul.f32 %v712, %v714
    %v716 = vadd.f32 %v712, %v715
    %vm717 = vweird.f32 %v386
    %vm718 = vweird.f32 %v712
    %vm719 = vmor %vm717, %vm718
    %v720 = vsel %vm719, %v712, %v716
    %v721 = vand.u32 2147483647, %v386
    %vm722 = vcmp.eq.f32.partialorder %v721, 8.507059e+37
    %v723 = vand.u32 %v386, 2147483648
    %v724 = vor.u32 1.1754944e-38, %v723
    %v725 = vsel %vm722, %v724, %v720
    %v726 = vmul.f32 1.0, %v725
    %v727 = vrcp.pop %v387
    %v728 = vmul.f32 %v387, %v727
    %v729 = vsub.f32 1.0, %v728
    %v730 = vmul.f32 %v727, %v729
    %v731 = vadd.f32 %v727, %v730
    %vm732 = vweird.f32 %v387
    %vm733 = vweird.f32 %v727
    %vm734 = vmor %vm732, %vm733
    %v735 = vsel %vm734, %v727, %v731
    %v736 = vand.u32 2147483647, %v387
    %vm737 = vcmp.eq.f32.partialorder %v736, 8.507059e+37
    %v738 = vand.u32 %v387, 2147483648
    %v739 = vor.u32 1.1754944e-38, %v738
    %v740 = vsel %vm737, %v739, %v735
    %v741 = vmul.f32 1.0, %v740
    %v742 = vrcp.pop %v388
    %v743 = vmul.f32 %v388, %v742
    %v744 = vsub.f32 1.0, %v743
    %v745 = vmul.f32 %v742, %v744
    %v746 = vadd.f32 %v742, %v745
    %vm747 = vweird.f32 %v388
    %vm748 = vweird.f32 %v742
    %vm749 = vmor %vm747, %vm748
    %v750 = vsel %vm749, %v742, %v746
    %v751 = vand.u32 2147483647, %v388
    %vm752 = vcmp.eq.f32.partialorder %v751, 8.507059e+37
    %v753 = vand.u32 %v388, 2147483648
    %v754 = vor.u32 1.1754944e-38, %v753
    %v755 = vsel %vm752, %v754, %v750
    %v756 = vmul.f32 1.0, %v755
    %v757 = vrcp.pop %v389
    %v758 = vmul.f32 %v389, %v757
    %v759 = vsub.f32 1.0, %v758
    %v760 = vmul.f32 %v757, %v759
    %v761 = vadd.f32 %v757, %v760
    %vm762 = vweird.f32 %v389
    %vm763 = vweird.f32 %v757
    %vm764 = vmor %vm762, %vm763
    %v765 = vsel %vm764, %v757, %v761
    %v766 = vand.u32 2147483647, %v389
    %vm767 = vcmp.eq.f32.partialorder %v766, 8.507059e+37
    %v768 = vand.u32 %v389, 2147483648
    %v769 = vor.u32 1.1754944e-38, %v768
    %v770 = vsel %vm767, %v769, %v765
    %v771 = vmul.f32 1.0, %v770
    %v772 = vrcp.pop %v390
    %v773 = vmul.f32 %v390, %v772
    %v774 = vsub.f32 1.0, %v773
    %v775 = vmul.f32 %v772, %v774
    %v776 = vadd.f32 %v772, %v775
    %vm777 = vweird.f32 %v390
    %vm778 = vweird.f32 %v772
    %vm779 = vmor %vm777, %vm778
    %v780 = vsel %vm779, %v772, %v776
    %v781 = vand.u32 2147483647, %v390
    %vm782 = vcmp.eq.f32.partialorder %v781, 8.507059e+37
    %v783 = vand.u32 %v390, 2147483648
    %v784 = vor.u32 1.1754944e-38, %v783
    %v785 = vsel %vm782, %v784, %v780
    %v786 = vmul.f32 1.0, %v785
    %v787 = vrcp.pop %v391
    %v788 = vmul.f32 %v391, %v787
    %v789 = vsub.f32 1.0, %v788
    %v790 = vmul.f32 %v787, %v789
    %v791 = vadd.f32 %v787, %v790
    %vm792 = vweird.f32 %v391
    %vm793 = vweird.f32 %v787
    %vm794 = vmor %vm792, %vm793
    %v795 = vsel %vm794, %v787, %v791
    %v796 = vand.u32 2147483647, %v391
    %vm797 = vcmp.eq.f32.partialorder %v796, 8.507059e+37
    %v798 = vand.u32 %v391, 2147483648
    %v799 = vor.u32 1.1754944e-38, %v798
    %v800 = vsel %vm797, %v799, %v795
    %v801 = vmul.f32 1.0, %v800
    %v802 = vrcp.pop %v392
    %v803 = vmul.f32 %v392, %v802
    %v804 = vsub.f32 1.0, %v803
    %v805 = vmul.f32 %v802, %v804
    %v806 = vadd.f32 %v802, %v805
    %vm807 = vweird.f32 %v392
    %vm808 = vweird.f32 %v802
    %vm809 = vmor %vm807, %vm808
    %v810 = vsel %vm809, %v802, %v806
    %v811 = vand.u32 2147483647, %v392
    %vm812 = vcmp.eq.f32.partialorder %v811, 8.507059e+37
    %v813 = vand.u32 %v392, 2147483648
    %v814 = vor.u32 1.1754944e-38, %v813
    %v815 = vsel %vm812, %v814, %v810
    %v816 = vmul.f32 1.0, %v815
    %v817 = vrcp.pop %v393
    %v818 = vmul.f32 %v393, %v817
    %v819 = vsub.f32 1.0, %v818
    %v820 = vmul.f32 %v817, %v819
    %v821 = vadd.f32 %v817, %v820
    %vm822 = vweird.f32 %v393
    %vm823 = vweird.f32 %v817
    %vm824 = vmor %vm822, %vm823
    %v825 = vsel %vm824, %v817, %v821
    %v826 = vand.u32 2147483647, %v393
    %vm827 = vcmp.eq.f32.partialorder %v826, 8.507059e+37
    %v828 = vand.u32 %v393, 2147483648
    %v829 = vor.u32 1.1754944e-38, %v828
    %v830 = vsel %vm827, %v829, %v825
    %v831 = vmul.f32 1.0, %v830
    %v832 = vrcp.pop %v394
    %v833 = vmul.f32 %v394, %v832
    %v834 = vsub.f32 1.0, %v833
    %v835 = vmul.f32 %v832, %v834
    %v836 = vadd.f32 %v832, %v835
    %vm837 = vweird.f32 %v394
    %vm838 = vweird.f32 %v832
    %vm839 = vmor %vm837, %vm838
    %v840 = vsel %vm839, %v832, %v836
    %v841 = vand.u32 2147483647, %v394
    %vm842 = vcmp.eq.f32.partialorder %v841, 8.507059e+37
    %v843 = vand.u32 %v394, 2147483648
    %v844 = vor.u32 1.1754944e-38, %v843
    %v845 = vsel %vm842, %v844, %v840
    %v846 = vmul.f32 1.0, %v845
    %v847 = vrcp.pop %v395
    %v848 = vmul.f32 %v395, %v847
    %v849 = vsub.f32 1.0, %v848
    %v850 = vmul.f32 %v847, %v849
    %v851 = vadd.f32 %v847, %v850
    %vm852 = vweird.f32 %v395
    %vm853 = vweird.f32 %v847
    %vm854 = vmor %vm852, %vm853
    %v855 = vsel %vm854, %v847, %v851
    %v856 = vand.u32 2147483647, %v395
    %vm857 = vcmp.eq.f32.partialorder %v856, 8.507059e+37
    %v858 = vand.u32 %v395, 2147483648
    %v859 = vor.u32 1.1754944e-38, %v858
    %v860 = vsel %vm857, %v859, %v855
    %v861 = vmul.f32 1.0, %v860
    %v862 = vrcp.pop %v396
    %v863 = vmul.f32 %v396, %v862
    %v864 = vsub.f32 1.0, %v863
    %v865 = vmul.f32 %v862, %v864
    %v866 = vadd.f32 %v862, %v865
    %vm867 = vweird.f32 %v396
    %vm868 = vweird.f32 %v862
    %vm869 = vmor %vm867, %vm868
    %v870 = vsel %vm869, %v862, %v866
    %v871 = vand.u32 2147483647, %v396
    %vm872 = vcmp.eq.f32.partialorder %v871, 8.507059e+37
    %v873 = vand.u32 %v396, 2147483648
    %v874 = vor.u32 1.1754944e-38, %v873
    %v875 = vsel %vm872, %v874, %v870
    %v876 = vmul.f32 1.0, %v875
    %v877 = vmul.f32 %v63, %v411
    %v878 = vmul.f32 %v64, %v426
    %v879 = vmul.f32 %v65, %v441
    %v880 = vmul.f32 %v66, %v456
    %v881 = vmul.f32 %v67, %v471
    %v882 = vmul.f32 %v68, %v486
    %v883 = vmul.f32 %v69, %v501
    %v884 = vmul.f32 %v70, %v516
    %v885 = vmul.f32 %v71, %v531
    %v886 = vmul.f32 %v72, %v546
    %v887 = vmul.f32 %v73, %v561
    %v888 = vmul.f32 %v74, %v576
    %v889 = vmul.f32 %v75, %v591
    %v890 = vmul.f32 %v76, %v606
    %v891 = vmul.f32 %v77, %v621
    %v892 = vmul.f32 %v78, %v636
    %v893 = vmul.f32 %v79, %v651
    %v894 = vmul.f32 %v80, %v666
    %v895 = vmul.f32 %v81, %v681
    %v896 = vmul.f32 %v82, %v696
    %v897 = vmul.f32 %v83, %v711
    %v898 = vmul.f32 %v84, %v726
    %v899 = vmul.f32 %v85, %v741
    %v900 = vmul.f32 %v86, %v756
    %v901 = vmul.f32 %v87, %v771
    %v902 = vmul.f32 %v88, %v786
    %v903 = vmul.f32 %v89, %v801
    %v904 = vmul.f32 %v90, %v816
    %v905 = vmul.f32 %v91, %v831
    %v906 = vmul.f32 %v92, %v846
    %v907 = vmul.f32 %v93, %v861
    %v908 = vmul.f32 %v94, %v876
    %v909 = vperm.slane %v95, 0
    %v910 = vmul.f32 %v877, %v909
    %v911 = vmul.f32 %v878, %v909
    %v912 = vmul.f32 %v879, %v909
    %v913 = vmul.f32 %v880, %v909
    %v914 = vmul.f32 %v881, %v909
    %v915 = vmul.f32 %v882, %v909
    %v916 = vmul.f32 %v883, %v909
    %v917 = vmul.f32 %v884, %v909
    %v918 = vmul.f32 %v885, %v909
    %v919 = vmul.f32 %v886, %v909
    %v920 = vmul.f32 %v887, %v909
    %v921 = vmul.f32 %v888, %v909
    %v922 = vmul.f32 %v889, %v909
    %v923 = vmul.f32 %v890, %v909
    %v924 = vmul.f32 %v891, %v909
    %v925 = vmul.f32 %v892, %v909
    %v926 = vmul.f32 %v893, %v909
    %v927 = vmul.f32 %v894, %v909
    %v928 = vmul.f32 %v895, %v909
    %v929 = vmul.f32 %v896, %v909
    %v930 = vmul.f32 %v897, %v909
    %v931 = vmul.f32 %v898, %v909
    %v932 = vmul.f32 %v899, %v909
    %v933 = vmul.f32 %v900, %v909
    %v934 = vmul.f32 %v901, %v909
    %v935 = vmul.f32 %v902, %v909
    %v936 = vmul.f32 %v903, %v909
    %v937 = vmul.f32 %v904, %v909
    %v938 = vmul.f32 %v905, %v909
    %v939 = vmul.f32 %v906, %v909
    %v940 = vmul.f32 %v907, %v909
    %v941 = vmul.f32 %v908, %v909
    %v942 = vadd.f32 %v910, %v63
    %v943 = vadd.f32 %v911, %v64
    %v944 = vadd.f32 %v912, %v65
    %v945 = vadd.f32 %v913, %v66
    %v946 = vadd.f32 %v914, %v67
    %v947 = vadd.f32 %v915, %v68
    %v948 = vadd.f32 %v916, %v69
    %v949 = vadd.f32 %v917, %v70
    %v950 = vadd.f32 %v918, %v71
    %v951 = vadd.f32 %v919, %v72
    %v952 = vadd.f32 %v920, %v73
    %v953 = vadd.f32 %v921, %v74
    %v954 = vadd.f32 %v922, %v75
    %v955 = vadd.f32 %v923, %v76
    %v956 = vadd.f32 %v924, %v77
    %v957 = vadd.f32 %v925, %v78
    %v958 = vadd.f32 %v926, %v79
    %v959 = vadd.f32 %v927, %v80
    %v960 = vadd.f32 %v928, %v81
    %v961 = vadd.f32 %v929, %v82
    %v962 = vadd.f32 %v930, %v83
    %v963 = vadd.f32 %v931, %v84
    %v964 = vadd.f32 %v932, %v85
    %v965 = vadd.f32 %v933, %v86
    %v966 = vadd.f32 %v934, %v87
    %v967 = vadd.f32 %v935, %v88
    %v968 = vadd.f32 %v936, %v89
    %v969 = vadd.f32 %v937, %v90
    %v970 = vadd.f32 %v938, %v91
    %v971 = vadd.f32 %v939, %v92
    %v972 = vadd.f32 %v940, %v93
    %v973 = vadd.f32 %v941, %v94
    %974 = vst [vmem:[#allocation8] sm:$0xff] %v942
    %975 = vst [vmem:[#allocation8 + $0x8] sm:$0xff] %v943
    %976 = vst [vmem:[#allocation8 + $0x10] sm:$0xff] %v944
    %977 = vst [vmem:[#allocation8 + $0x18] sm:$0xff] %v945
    %978 = vst [vmem:[#allocation8 + $0x20] sm:$0xff] %v946
    %979 = vst [vmem:[#allocation8 + $0x28] sm:$0xff] %v947
    %980 = vst [vmem:[#allocation8 + $0x30] sm:$0xff] %v948
    %981 = vst [vmem:[#allocation8 + $0x38] sm:$0xff] %v949
    %982 = vst [vmem:[#allocation8 + $0x40] sm:$0xff] %v950
    %983 = vst [vmem:[#allocation8 + $0x48] sm:$0xff] %v951
    %984 = vst [vmem:[#allocation8 + $0x50] sm:$0xff] %v952
    %985 = vst [vmem:[#allocation8 + $0x58] sm:$0xff] %v953
    %986 = vst [vmem:[#allocation8 + $0x60] sm:$0xff] %v954
    %987 = vst [vmem:[#allocation8 + $0x68] sm:$0xff] %v955
    %988 = vst [vmem:[#allocation8 + $0x70] sm:$0xff] %v956
    %989 = vst [vmem:[#allocation8 + $0x78] sm:$0xff] %v957
    %990 = vst [vmem:[#allocation8 + $0x80] sm:$0xff] %v958
    %991 = vst [vmem:[#allocation8 + $0x88] sm:$0xff] %v959
    %992 = vst [vmem:[#allocation8 + $0x90] sm:$0xff] %v960
    %993 = vst [vmem:[#allocation8 + $0x98] sm:$0xff] %v961
    %994 = vst [vmem:[#allocation8 + $0xa0] sm:$0xff] %v962
    %995 = vst [vmem:[#allocation8 + $0xa8] sm:$0xff] %v963
    %996 = vst [vmem:[#allocation8 + $0xb0] sm:$0xff] %v964
    %997 = vst [vmem:[#allocation8 + $0xb8] sm:$0xff] %v965
    %998 = vst [vmem:[#allocation8 + $0xc0] sm:$0xff] %v966
    %999 = vst [vmem:[#allocation8 + $0xc8] sm:$0xff] %v967
    %1000 = vst [vmem:[#allocation8 + $0xd0] sm:$0xff] %v968
    %1001 = vst [vmem:[#allocation8 + $0xd8] sm:$0xff] %v969
    %1002 = vst [vmem:[#allocation8 + $0xe0] sm:$0xff] %v970
    %1003 = vst [vmem:[#allocation8 + $0xe8] sm:$0xff] %v971
    %1004 = vst [vmem:[#allocation8 + $0xf0] sm:$0xff] %v972
    %1005 = vst [vmem:[#allocation8 + $0xf8] sm:$0xff] %v973
    // Predicated region
    $region30: #{tpu_custom_call.1} parent=1 // pred_check
      _
    $region31: #{tpu_custom_call.1} parent=1 // pred_check_branch
      %1007 = sbr.rel (0) target = $region33
    $region32: #{tpu_custom_call.1} parent=1 // pred_region
      %1009 = vsyncadd [#allocation4], 0
      %s1010 = sshll.u32 [#allocation8], 4
      %s1011 = int_to_ptr.vmem [resolvable:$true] %s1010
      %s1012 = sshll.u32 %s4, 4
      %s1013 = int_to_ptr.hbm [resolvable:$true] %s1012
      %1018 = dma.vmem_to_hbm [thread:$0]  %s1011, 4096, %s1013, [#allocation4], 128, 128, 8
    $region33: #{tpu_custom_call.1} parent=1 // pred_fallthru
      _
    // Predicated region
    $region34: #{tpu_custom_call.1} parent=1 // pred_check
      _
    $region35: #{tpu_custom_call.1} parent=1 // pred_check_branch
      %1020 = sbr.rel (0) target = $region37
    $region36: #{tpu_custom_call.1} parent=1 // pred_region
      %1022 = dma.done [#allocation4], 4096
    $region37: #{tpu_custom_call.1} parent=1 // pred_fallthru
      _
    %1023 = vsyncpa [#allocation3], 1
    %1024 = vsyncpa [#allocation6], 1
    %1025 = vsyncpa [#allocation4], 1

</llo_original>
